<compile_context>
chip_gen: v7x
topology: tpu7x:2x2x1
jax: 0.10.0
libtpu: 0.0.40
codegen_flags: <defaults>
</compile_context>

<pallas_src>
import jax
import jax.numpy as jnp
from jax import lax
from jax.experimental import pallas as pl
from jax.experimental.pallas import tpu as pltpu

ALPHA = 0.2     # LeakyReLU negative slope
EPS = 1e-5      # BatchNorm eps
LANE = 128


def _round_up(v, m):
    return (v + m - 1) // m * m


def make_dilated_resblock_kernel(N, Ci, Co, L, K, M, FR, BK):
    p1 = 2 * (K - 1) // 2          # conv_1 padding (dilation 2)
    p2 = 4 * (K - 1) // 2          # conv_2 padding (dilation 4)
    p_in = K // 2                  # skip conv padding (dilation 1)
    inv_count = 1.0 / float(N * L)

    def kernel(x_ref, mask_ref, w_in_ref, b_in_ref,
               w1_ref, b1_ref, g1_ref, be1_ref,
               w2_ref, b2_ref, g2_ref, be2_ref,
               out_ref, h1_scr):
        mask = mask_ref[...]                       # (1, M) f32, 1 at valid output columns

        def im2col(ref, dil, pad):
            # K statically-shifted views of the per-sample P-padded flat layout, stacked
            # along the contraction (sublane) axis -> (C*K, M); one MXU matmul per conv.
            taps = [ref[:, pl.ds(FR + dil * t - pad, M)] for t in range(K)]
            return jnp.concatenate(taps, axis=0).astype(jnp.bfloat16)

        def bn_lrelu(c, g, b):
            # training-mode BatchNorm1d: biased stats over the N*L valid columns
            m = jnp.sum(c * mask, axis=1, keepdims=True) * inv_count
            v = jnp.sum(((c - m) ** 2) * mask, axis=1, keepdims=True) * inv_count
            h = (c - m) * lax.rsqrt(v + EPS) * g + b
            return jnp.where(h >= 0, h, ALPHA * h)

        # ---- conv_1 (dilation=2): single batched matmul over all samples and taps ----
        c1 = jnp.dot(w1_ref[...], im2col(x_ref, 2, p1),
                     preferred_element_type=jnp.float32) + b1_ref[...]
        h1 = bn_lrelu(c1, g1_ref[...], be1_ref[...]) * mask   # re-zero conv_2's padding halo

        # lane-aligned scratch holding conv_2's input: zero only the 128-wide margins
        h1_scr[:, pl.ds(0, FR)] = jnp.zeros((Co, FR), jnp.float32)
        h1_scr[:, pl.ds(FR + M, BK)] = jnp.zeros((Co, BK), jnp.float32)
        h1_scr[:, pl.ds(FR, M)] = h1

        # ---- conv_2 (dilation=4) ----
        c2 = jnp.dot(w2_ref[...], im2col(h1_scr, 4, p2),
                     preferred_element_type=jnp.float32) + b2_ref[...]
        h2 = bn_lrelu(c2, g2_ref[...], be2_ref[...])

        # ---- in_conv skip (dilation=1) + residual add ----
        skip = jnp.dot(w_in_ref[...], im2col(x_ref, 1, p_in),
                       preferred_element_type=jnp.float32) + b_in_ref[...]

        out_ref[...] = (h2 + skip).astype(out_ref.dtype)

    return kernel


def dilated_resblock_forward(x, params, K):
    assert K % 2 == 1, "skip conv 'same' padding assumes odd kernel size"
    N, Ci, L = x.shape
    Co = params["w1"].shape[0]
    P = 2 * (K - 1)                    # max conv pad (dilation 4)
    assert P <= LANE
    Lpp = L + 2 * P                    # per-sample padded segment
    M = _round_up(N * Lpp, LANE)       # lane-dense working width (multiple of 128)
    FR = BK = LANE                     # lane-aligned halo margins for shifted tap reads

    # Flattened, per-sample P-padded layout: column FR + n*Lpp + P + l holds x[n, :, l].
    xg = jnp.pad(x, ((0, 0), (0, 0), (P, P)))                       # (N, Ci, Lpp)
    xflat = jnp.transpose(xg, (1, 0, 2)).reshape(Ci, N * Lpp)
    xin = jnp.zeros((Ci, FR + M + BK), jnp.float32).at[:, FR:FR + N * Lpp].set(xflat)

    col = jnp.arange(M)
    j = col % Lpp
    mask = ((col < N * Lpp) & (j >= P) & (j < P + L)).astype(jnp.float32).reshape(1, M)

    # (Co, Ci, K) -> (Co, K*Ci) matching the kernel's tap-major im2col row order; bf16 MXU operands
    as_w2d = lambda w: jnp.transpose(w, (0, 2, 1)).reshape(w.shape[0], -1).astype(jnp.bfloat16)
    as_col = lambda v: v.reshape(-1, 1).astype(jnp.float32)

    kernel = make_dilated_resblock_kernel(N, Ci, Co, L, K, M, FR, BK)

    flops = 2 * M * K * (2 * Ci * Co + Co * Co)
    bytes_accessed = (xin.size + mask.size + Co * M) * 4 \
        + (2 * Ci + Co) * Co * K * 2 + 7 * Co * 4
    cost = pl.CostEstimate(flops=flops, transcendentals=2 * Co, bytes_accessed=bytes_accessed)

    # TODO(synk): for production (N, C, L) add an L-tile grid with halo exchange plus a
    # two-pass global BN-stat accumulation (and dimension_semantics=("parallel", ...) to use
    # both v7x TensorCores); at these shapes the whole block fits VMEM in one invocation.
    out2d = pl.pallas_call(
        kernel,
        out_shape=jax.ShapeDtypeStruct((Co, M), jnp.float32),
        scratch_shapes=[pltpu.VMEM((Co, FR + M + BK), jnp.float32)],
        compiler_params=pltpu.CompilerParams(vmem_limit_bytes=32 * 1024 * 1024),
        cost_estimate=cost,
    )(xin, mask,
      as_w2d(params["w_in"]), as_col(params["b_in"]),
      as_w2d(params["w1"]), as_col(params["b1"]), as_col(params["g1"]), as_col(params["be1"]),
      as_w2d(params["w2"]), as_col(params["b2"]), as_col(params["g2"]), as_col(params["be2"]))

    out = out2d[:, :N * Lpp].reshape(Co, N, Lpp)[:, :, P:P + L]     # drop halos / round-up pad
    return jnp.transpose(out, (1, 0, 2))                            # (N, Co, L)


def reference_forward(x, p, K):
    def conv(v, w, b, pad, dil):
        y = lax.conv_general_dilated(v, w, window_strides=(1,), padding=[(pad, pad)],
                                     rhs_dilation=(dil,),
                                     dimension_numbers=("NCH", "OIH", "NCH"))
        return y + b[None, :, None]

    def bn(v, g, be):
        m = v.mean(axis=(0, 2), keepdims=True)
        var = ((v - m) ** 2).mean(axis=(0, 2), keepdims=True)
        return (v - m) / jnp.sqrt(var + EPS) * g[None, :, None] + be[None, :, None]

    def lrelu(v):
        return jnp.where(v >= 0, v, ALPHA * v)

    skip = conv(x, p["w_in"], p["b_in"], K // 2, 1)
    h = lrelu(bn(conv(x, p["w1"], p["b1"], 2 * (K - 1) // 2, 2), p["g1"], p["be1"]))
    h = lrelu(bn(conv(h, p["w2"], p["b2"], 4 * (K - 1) // 2, 4), p["g2"], p["be2"]))
    return h + skip


if __name__ == "__main__":
    # shapes matching the 2nd DilatedResBlock of the lite Generator: Ci=8 -> Co=16, K=11
    N, Ci, Co, L, K = 2, 8, 16, 64, 11

    key = jax.random.PRNGKey(0)
    ks = jax.random.split(key, 11)
    params = {
        "w_in": 0.1 * jax.random.normal(ks[0], (Co, Ci, K), jnp.float32),
        "b_in": 0.1 * jax.random.normal(ks[1], (Co,), jnp.float32),
        "w1":   0.1 * jax.random.normal(ks[2], (Co, Ci, K), jnp.float32),
        "b1":   0.1 * jax.random.normal(ks[3], (Co,), jnp.float32),
        "g1":   1.0 + 0.1 * jax.random.normal(ks[4], (Co,), jnp.float32),
        "be1":  0.1 * jax.random.normal(ks[5], (Co,), jnp.float32),
        "w2":   0.1 * jax.random.normal(ks[6], (Co, Co, K), jnp.float32),
        "b2":   0.1 * jax.random.normal(ks[7], (Co,), jnp.float32),
        "g2":   1.0 + 0.1 * jax.random.normal(ks[8], (Co,), jnp.float32),
        "be2":  0.1 * jax.random.normal(ks[9], (Co,), jnp.float32),
    }
    x = jax.random.normal(ks[10], (N, Ci, L), jnp.float32)

    out = jax.block_until_ready(dilated_resblock_forward(x, params, K))
    ref = jax.block_until_ready(reference_forward(x, params, K))

    assert out.shape == (N, Co, L)
    # tolerance accounts for bf16 MXU operands (f32 accumulation); indexing errors would be O(1)
    assert jnp.allclose(out, ref, rtol=3e-2, atol=3e-2), "mismatch vs JAX reference"

    print("KERNEL_OK")
</pallas_src>

<mosaic_0001>
module attributes {stable_mosaic.version = 11 : i64} {
  func.func @kernel(%arg0: memref<8x512xf32, #tpu.memory_space<vmem>>, %arg1: memref<1x256xf32, #tpu.memory_space<vmem>>, %arg2: memref<16x88xbf16, #tpu.memory_space<vmem>>, %arg3: memref<16x1xf32, #tpu.memory_space<vmem>>, %arg4: memref<16x88xbf16, #tpu.memory_space<vmem>>, %arg5: memref<16x1xf32, #tpu.memory_space<vmem>>, %arg6: memref<16x1xf32, #tpu.memory_space<vmem>>, %arg7: memref<16x1xf32, #tpu.memory_space<vmem>>, %arg8: memref<16x176xbf16, #tpu.memory_space<vmem>>, %arg9: memref<16x1xf32, #tpu.memory_space<vmem>>, %arg10: memref<16x1xf32, #tpu.memory_space<vmem>>, %arg11: memref<16x1xf32, #tpu.memory_space<vmem>>, %arg12: memref<16x256xf32, #tpu.memory_space<vmem>>, %arg13: memref<16x512xf32, #tpu.memory_space<vmem>>) attributes {dimension_semantics = [], scalar_prefetch = 0 : i64, scratch_operands = 1 : i64, tpu.core_type = #tpu.core_type<tc>} {
    %c0 = arith.constant 0 : index
    %c0_0 = arith.constant 0 : index
    %0 = vector.load %arg1[%c0, %c0_0] : memref<1x256xf32, #tpu.memory_space<vmem>>, vector<1x256xf32>
    %c0_1 = arith.constant 0 : index
    %c0_2 = arith.constant 0 : index
    %1 = vector.load %arg4[%c0_1, %c0_2] : memref<16x88xbf16, #tpu.memory_space<vmem>>, vector<16x88xbf16>
    %c0_3 = arith.constant 0 : index
    %c118 = arith.constant 118 : index
    %2 = vector.load %arg0[%c0_3, %c118] : memref<8x512xf32, #tpu.memory_space<vmem>>, vector<8x256xf32>
    %c0_4 = arith.constant 0 : index
    %c120 = arith.constant 120 : index
    %3 = vector.load %arg0[%c0_4, %c120] : memref<8x512xf32, #tpu.memory_space<vmem>>, vector<8x256xf32>
    %c0_5 = arith.constant 0 : index
    %c122 = arith.constant 122 : index
    %4 = vector.load %arg0[%c0_5, %c122] : memref<8x512xf32, #tpu.memory_space<vmem>>, vector<8x256xf32>
    %c0_6 = arith.constant 0 : index
    %c124 = arith.constant 124 : index
    %5 = vector.load %arg0[%c0_6, %c124] : memref<8x512xf32, #tpu.memory_space<vmem>>, vector<8x256xf32>
    %c0_7 = arith.constant 0 : index
    %c126 = arith.constant 126 : index
    %6 = vector.load %arg0[%c0_7, %c126] : memref<8x512xf32, #tpu.memory_space<vmem>>, vector<8x256xf32>
    %c0_8 = arith.constant 0 : index
    %c128 = arith.constant 128 : index
    %7 = vector.load %arg0[%c0_8, %c128] : memref<8x512xf32, #tpu.memory_space<vmem>>, vector<8x256xf32>
    %c0_9 = arith.constant 0 : index
    %c130 = arith.constant 130 : index
    %8 = vector.load %arg0[%c0_9, %c130] : memref<8x512xf32, #tpu.memory_space<vmem>>, vector<8x256xf32>
    %c0_10 = arith.constant 0 : index
    %c132 = arith.constant 132 : index
    %9 = vector.load %arg0[%c0_10, %c132] : memref<8x512xf32, #tpu.memory_space<vmem>>, vector<8x256xf32>
    %c0_11 = arith.constant 0 : index
    %c134 = arith.constant 134 : index
    %10 = vector.load %arg0[%c0_11, %c134] : memref<8x512xf32, #tpu.memory_space<vmem>>, vector<8x256xf32>
    %c0_12 = arith.constant 0 : index
    %c136 = arith.constant 136 : index
    %11 = vector.load %arg0[%c0_12, %c136] : memref<8x512xf32, #tpu.memory_space<vmem>>, vector<8x256xf32>
    %c0_13 = arith.constant 0 : index
    %c138 = arith.constant 138 : index
    %12 = vector.load %arg0[%c0_13, %c138] : memref<8x512xf32, #tpu.memory_space<vmem>>, vector<8x256xf32>
    %13 = tpu.concatenate %2, %3, %4, %5, %6, %7, %8, %9, %10, %11, %12 in 0 : vector<8x256xf32>, vector<8x256xf32>, vector<8x256xf32>, vector<8x256xf32>, vector<8x256xf32>, vector<8x256xf32>, vector<8x256xf32>, vector<8x256xf32>, vector<8x256xf32>, vector<8x256xf32>, vector<8x256xf32> -> vector<88x256xf32>
    %14 = arith.truncf %13 : vector<88x256xf32> to vector<88x256xbf16>
    %cst = arith.constant dense<0.000000e+00> : vector<16x256xf32>
    %15 = tpu.matmul %1, %14, %cst {dimension_numbers = #tpu.dot_dimension_numbers<[1], [0], [0], [1], [0, 0, 1, 1], [], []>} : vector<16x88xbf16>, vector<88x256xbf16>, vector<16x256xf32> -> vector<16x256xf32>
    %c0_14 = arith.constant 0 : index
    %c0_15 = arith.constant 0 : index
    %16 = vector.load %arg5[%c0_14, %c0_15] : memref<16x1xf32, #tpu.memory_space<vmem>>, vector<16x1xf32>
    %17 = vector.broadcast %16 : vector<16x1xf32> to vector<16x256xf32>
    %18 = arith.addf %15, %17 : vector<16x256xf32>
    %c0_16 = arith.constant 0 : index
    %c0_17 = arith.constant 0 : index
    %19 = vector.load %arg6[%c0_16, %c0_17] : memref<16x1xf32, #tpu.memory_space<vmem>>, vector<16x1xf32>
    %c0_18 = arith.constant 0 : index
    %c0_19 = arith.constant 0 : index
    %20 = vector.load %arg7[%c0_18, %c0_19] : memref<16x1xf32, #tpu.memory_space<vmem>>, vector<16x1xf32>
    %21 = vector.broadcast %0 : vector<1x256xf32> to vector<16x256xf32>
    %22 = arith.mulf %18, %21 : vector<16x256xf32>
    %cst_20 = arith.constant dense<0.000000e+00> : vector<16xf32>
    %23 = vector.multi_reduction <add>, %22, %cst_20 [1] : vector<16x256xf32> to vector<16xf32>
    %24 = vector.shape_cast %23 : vector<16xf32> to vector<16x1xf32>
    %cst_21 = arith.constant 7.812500e-03 : f32
    %25 = vector.broadcast %cst_21 : f32 to vector<16x1xf32>
    %26 = arith.mulf %24, %25 : vector<16x1xf32>
    %27 = vector.broadcast %26 : vector<16x1xf32> to vector<16x256xf32>
    %28 = arith.subf %18, %27 : vector<16x256xf32>
    %29 = arith.mulf %28, %28 : vector<16x256xf32>
    %30 = vector.broadcast %0 : vector<1x256xf32> to vector<16x256xf32>
    %31 = arith.mulf %29, %30 : vector<16x256xf32>
    %cst_22 = arith.constant dense<0.000000e+00> : vector<16xf32>
    %32 = vector.multi_reduction <add>, %31, %cst_22 [1] : vector<16x256xf32> to vector<16xf32>
    %33 = vector.shape_cast %32 : vector<16xf32> to vector<16x1xf32>
    %cst_23 = arith.constant 7.812500e-03 : f32
    %34 = vector.broadcast %cst_23 : f32 to vector<16x1xf32>
    %35 = arith.mulf %33, %34 : vector<16x1xf32>
    %36 = vector.broadcast %26 : vector<16x1xf32> to vector<16x256xf32>
    %37 = arith.subf %18, %36 : vector<16x256xf32>
    %cst_24 = arith.constant 9.99999974E-6 : f32
    %38 = vector.broadcast %cst_24 : f32 to vector<16x1xf32>
    %39 = arith.addf %35, %38 : vector<16x1xf32>
    %40 = math.rsqrt %39 : vector<16x1xf32>
    %41 = vector.broadcast %40 : vector<16x1xf32> to vector<16x256xf32>
    %42 = arith.mulf %37, %41 : vector<16x256xf32>
    %43 = vector.broadcast %19 : vector<16x1xf32> to vector<16x256xf32>
    %44 = arith.mulf %42, %43 : vector<16x256xf32>
    %45 = vector.broadcast %20 : vector<16x1xf32> to vector<16x256xf32>
    %46 = arith.addf %44, %45 : vector<16x256xf32>
    %cst_25 = arith.constant 0.000000e+00 : f32
    %47 = vector.broadcast %cst_25 : f32 to vector<16x256xf32>
    %48 = arith.cmpf oge, %46, %47 : vector<16x256xf32>
    %cst_26 = arith.constant 2.000000e-01 : f32
    %49 = vector.broadcast %cst_26 : f32 to vector<16x256xf32>
    %50 = arith.mulf %49, %46 : vector<16x256xf32>
    %51 = arith.select %48, %46, %50 : vector<16x256xi1>, vector<16x256xf32>
    %52 = vector.broadcast %0 : vector<1x256xf32> to vector<16x256xf32>
    %53 = arith.mulf %51, %52 : vector<16x256xf32>
    %cst_27 = arith.constant 0.000000e+00 : f32
    %54 = vector.broadcast %cst_27 : f32 to vector<16x128xf32>
    %c0_28 = arith.constant 0 : index
    %c0_29 = arith.constant 0 : index
    %55 = vector.load %arg13[%c0_28, %c0_29] : memref<16x512xf32, #tpu.memory_space<vmem>>, vector<16x128xf32>
    tpu.vector_store %arg13[%c0_28, %c0_29], %54 {strides = array<i32>} : memref<16x512xf32, #tpu.memory_space<vmem>>, vector<16x128xf32>,
    %cst_30 = arith.constant 0.000000e+00 : f32
    %56 = vector.broadcast %cst_30 : f32 to vector<16x128xf32>
    %c0_31 = arith.constant 0 : index
    %c384 = arith.constant 384 : index
    %57 = vector.load %arg13[%c0_31, %c384] : memref<16x512xf32, #tpu.memory_space<vmem>>, vector<16x128xf32>
    tpu.vector_store %arg13[%c0_31, %c384], %56 {strides = array<i32>} : memref<16x512xf32, #tpu.memory_space<vmem>>, vector<16x128xf32>,
    %c0_32 = arith.constant 0 : index
    %c128_33 = arith.constant 128 : index
    %58 = vector.load %arg13[%c0_32, %c128_33] : memref<16x512xf32, #tpu.memory_space<vmem>>, vector<16x256xf32>
    tpu.vector_store %arg13[%c0_32, %c128_33], %53 {strides = array<i32>} : memref<16x512xf32, #tpu.memory_space<vmem>>, vector<16x256xf32>,
    %c0_34 = arith.constant 0 : index
    %c0_35 = arith.constant 0 : index
    %59 = vector.load %arg8[%c0_34, %c0_35] : memref<16x176xbf16, #tpu.memory_space<vmem>>, vector<16x176xbf16>
    %c0_36 = arith.constant 0 : index
    %c108 = arith.constant 108 : index
    %60 = vector.load %arg13[%c0_36, %c108] : memref<16x512xf32, #tpu.memory_space<vmem>>, vector<16x256xf32>
    %c0_37 = arith.constant 0 : index
    %c112 = arith.constant 112 : index
    %61 = vector.load %arg13[%c0_37, %c112] : memref<16x512xf32, #tpu.memory_space<vmem>>, vector<16x256xf32>
    %c0_38 = arith.constant 0 : index
    %c116 = arith.constant 116 : index
    %62 = vector.load %arg13[%c0_38, %c116] : memref<16x512xf32, #tpu.memory_space<vmem>>, vector<16x256xf32>
    %c0_39 = arith.constant 0 : index
    %c120_40 = arith.constant 120 : index
    %63 = vector.load %arg13[%c0_39, %c120_40] : memref<16x512xf32, #tpu.memory_space<vmem>>, vector<16x256xf32>
    %c0_41 = arith.constant 0 : index
    %c124_42 = arith.constant 124 : index
    %64 = vector.load %arg13[%c0_41, %c124_42] : memref<16x512xf32, #tpu.memory_space<vmem>>, vector<16x256xf32>
    %c0_43 = arith.constant 0 : index
    %c128_44 = arith.constant 128 : index
    %65 = vector.load %arg13[%c0_43, %c128_44] : memref<16x512xf32, #tpu.memory_space<vmem>>, vector<16x256xf32>
    %c0_45 = arith.constant 0 : index
    %c132_46 = arith.constant 132 : index
    %66 = vector.load %arg13[%c0_45, %c132_46] : memref<16x512xf32, #tpu.memory_space<vmem>>, vector<16x256xf32>
    %c0_47 = arith.constant 0 : index
    %c136_48 = arith.constant 136 : index
    %67 = vector.load %arg13[%c0_47, %c136_48] : memref<16x512xf32, #tpu.memory_space<vmem>>, vector<16x256xf32>
    %c0_49 = arith.constant 0 : index
    %c140 = arith.constant 140 : index
    %68 = vector.load %arg13[%c0_49, %c140] : memref<16x512xf32, #tpu.memory_space<vmem>>, vector<16x256xf32>
    %c0_50 = arith.constant 0 : index
    %c144 = arith.constant 144 : index
    %69 = vector.load %arg13[%c0_50, %c144] : memref<16x512xf32, #tpu.memory_space<vmem>>, vector<16x256xf32>
    %c0_51 = arith.constant 0 : index
    %c148 = arith.constant 148 : index
    %70 = vector.load %arg13[%c0_51, %c148] : memref<16x512xf32, #tpu.memory_space<vmem>>, vector<16x256xf32>
    %71 = tpu.concatenate %60, %61, %62, %63, %64, %65, %66, %67, %68, %69, %70 in 0 : vector<16x256xf32>, vector<16x256xf32>, vector<16x256xf32>, vector<16x256xf32>, vector<16x256xf32>, vector<16x256xf32>, vector<16x256xf32>, vector<16x256xf32>, vector<16x256xf32>, vector<16x256xf32>, vector<16x256xf32> -> vector<176x256xf32>
    %72 = arith.truncf %71 : vector<176x256xf32> to vector<176x256xbf16>
    %cst_52 = arith.constant dense<0.000000e+00> : vector<16x256xf32>
    %73 = tpu.matmul %59, %72, %cst_52 {dimension_numbers = #tpu.dot_dimension_numbers<[1], [0], [0], [1], [0, 0, 1, 1], [], []>} : vector<16x176xbf16>, vector<176x256xbf16>, vector<16x256xf32> -> vector<16x256xf32>
    %c0_53 = arith.constant 0 : index
    %c0_54 = arith.constant 0 : index
    %74 = vector.load %arg9[%c0_53, %c0_54] : memref<16x1xf32, #tpu.memory_space<vmem>>, vector<16x1xf32>
    %75 = vector.broadcast %74 : vector<16x1xf32> to vector<16x256xf32>
    %76 = arith.addf %73, %75 : vector<16x256xf32>
    %c0_55 = arith.constant 0 : index
    %c0_56 = arith.constant 0 : index
    %77 = vector.load %arg10[%c0_55, %c0_56] : memref<16x1xf32, #tpu.memory_space<vmem>>, vector<16x1xf32>
    %c0_57 = arith.constant 0 : index
    %c0_58 = arith.constant 0 : index
    %78 = vector.load %arg11[%c0_57, %c0_58] : memref<16x1xf32, #tpu.memory_space<vmem>>, vector<16x1xf32>
    %79 = vector.broadcast %0 : vector<1x256xf32> to vector<16x256xf32>
    %80 = arith.mulf %76, %79 : vector<16x256xf32>
    %cst_59 = arith.constant dense<0.000000e+00> : vector<16xf32>
    %81 = vector.multi_reduction <add>, %80, %cst_59 [1] : vector<16x256xf32> to vector<16xf32>
    %82 = vector.shape_cast %81 : vector<16xf32> to vector<16x1xf32>
    %cst_60 = arith.constant 7.812500e-03 : f32
    %83 = vector.broadcast %cst_60 : f32 to vector<16x1xf32>
    %84 = arith.mulf %82, %83 : vector<16x1xf32>
    %85 = vector.broadcast %84 : vector<16x1xf32> to vector<16x256xf32>
    %86 = arith.subf %76, %85 : vector<16x256xf32>
    %87 = arith.mulf %86, %86 : vector<16x256xf32>
    %88 = vector.broadcast %0 : vector<1x256xf32> to vector<16x256xf32>
    %89 = arith.mulf %87, %88 : vector<16x256xf32>
    %cst_61 = arith.constant dense<0.000000e+00> : vector<16xf32>
    %90 = vector.multi_reduction <add>, %89, %cst_61 [1] : vector<16x256xf32> to vector<16xf32>
    %91 = vector.shape_cast %90 : vector<16xf32> to vector<16x1xf32>
    %cst_62 = arith.constant 7.812500e-03 : f32
    %92 = vector.broadcast %cst_62 : f32 to vector<16x1xf32>
    %93 = arith.mulf %91, %92 : vector<16x1xf32>
    %94 = vector.broadcast %84 : vector<16x1xf32> to vector<16x256xf32>
    %95 = arith.subf %76, %94 : vector<16x256xf32>
    %cst_63 = arith.constant 9.99999974E-6 : f32
    %96 = vector.broadcast %cst_63 : f32 to vector<16x1xf32>
    %97 = arith.addf %93, %96 : vector<16x1xf32>
    %98 = math.rsqrt %97 : vector<16x1xf32>
    %99 = vector.broadcast %98 : vector<16x1xf32> to vector<16x256xf32>
    %100 = arith.mulf %95, %99 : vector<16x256xf32>
    %101 = vector.broadcast %77 : vector<16x1xf32> to vector<16x256xf32>
    %102 = arith.mulf %100, %101 : vector<16x256xf32>
    %103 = vector.broadcast %78 : vector<16x1xf32> to vector<16x256xf32>
    %104 = arith.addf %102, %103 : vector<16x256xf32>
    %cst_64 = arith.constant 0.000000e+00 : f32
    %105 = vector.broadcast %cst_64 : f32 to vector<16x256xf32>
    %106 = arith.cmpf oge, %104, %105 : vector<16x256xf32>
    %cst_65 = arith.constant 2.000000e-01 : f32
    %107 = vector.broadcast %cst_65 : f32 to vector<16x256xf32>
    %108 = arith.mulf %107, %104 : vector<16x256xf32>
    %109 = arith.select %106, %104, %108 : vector<16x256xi1>, vector<16x256xf32>
    %c0_66 = arith.constant 0 : index
    %c0_67 = arith.constant 0 : index
    %110 = vector.load %arg2[%c0_66, %c0_67] : memref<16x88xbf16, #tpu.memory_space<vmem>>, vector<16x88xbf16>
    %c0_68 = arith.constant 0 : index
    %c123 = arith.constant 123 : index
    %111 = vector.load %arg0[%c0_68, %c123] : memref<8x512xf32, #tpu.memory_space<vmem>>, vector<8x256xf32>
    %c0_69 = arith.constant 0 : index
    %c124_70 = arith.constant 124 : index
    %112 = vector.load %arg0[%c0_69, %c124_70] : memref<8x512xf32, #tpu.memory_space<vmem>>, vector<8x256xf32>
    %c0_71 = arith.constant 0 : index
    %c125 = arith.constant 125 : index
    %113 = vector.load %arg0[%c0_71, %c125] : memref<8x512xf32, #tpu.memory_space<vmem>>, vector<8x256xf32>
    %c0_72 = arith.constant 0 : index
    %c126_73 = arith.constant 126 : index
    %114 = vector.load %arg0[%c0_72, %c126_73] : memref<8x512xf32, #tpu.memory_space<vmem>>, vector<8x256xf32>
    %c0_74 = arith.constant 0 : index
    %c127 = arith.constant 127 : index
    %115 = vector.load %arg0[%c0_74, %c127] : memref<8x512xf32, #tpu.memory_space<vmem>>, vector<8x256xf32>
    %c0_75 = arith.constant 0 : index
    %c128_76 = arith.constant 128 : index
    %116 = vector.load %arg0[%c0_75, %c128_76] : memref<8x512xf32, #tpu.memory_space<vmem>>, vector<8x256xf32>
    %c0_77 = arith.constant 0 : index
    %c129 = arith.constant 129 : index
    %117 = vector.load %arg0[%c0_77, %c129] : memref<8x512xf32, #tpu.memory_space<vmem>>, vector<8x256xf32>
    %c0_78 = arith.constant 0 : index
    %c130_79 = arith.constant 130 : index
    %118 = vector.load %arg0[%c0_78, %c130_79] : memref<8x512xf32, #tpu.memory_space<vmem>>, vector<8x256xf32>
    %c0_80 = arith.constant 0 : index
    %c131 = arith.constant 131 : index
    %119 = vector.load %arg0[%c0_80, %c131] : memref<8x512xf32, #tpu.memory_space<vmem>>, vector<8x256xf32>
    %c0_81 = arith.constant 0 : index
    %c132_82 = arith.constant 132 : index
    %120 = vector.load %arg0[%c0_81, %c132_82] : memref<8x512xf32, #tpu.memory_space<vmem>>, vector<8x256xf32>
    %c0_83 = arith.constant 0 : index
    %c133 = arith.constant 133 : index
    %121 = vector.load %arg0[%c0_83, %c133] : memref<8x512xf32, #tpu.memory_space<vmem>>, vector<8x256xf32>
    %122 = tpu.concatenate %111, %112, %113, %114, %115, %116, %117, %118, %119, %120, %121 in 0 : vector<8x256xf32>, vector<8x256xf32>, vector<8x256xf32>, vector<8x256xf32>, vector<8x256xf32>, vector<8x256xf32>, vector<8x256xf32>, vector<8x256xf32>, vector<8x256xf32>, vector<8x256xf32>, vector<8x256xf32> -> vector<88x256xf32>
    %123 = arith.truncf %122 : vector<88x256xf32> to vector<88x256xbf16>
    %cst_84 = arith.constant dense<0.000000e+00> : vector<16x256xf32>
    %124 = tpu.matmul %110, %123, %cst_84 {dimension_numbers = #tpu.dot_dimension_numbers<[1], [0], [0], [1], [0, 0, 1, 1], [], []>} : vector<16x88xbf16>, vector<88x256xbf16>, vector<16x256xf32> -> vector<16x256xf32>
    %c0_85 = arith.constant 0 : index
    %c0_86 = arith.constant 0 : index
    %125 = vector.load %arg3[%c0_85, %c0_86] : memref<16x1xf32, #tpu.memory_space<vmem>>, vector<16x1xf32>
    %126 = vector.broadcast %125 : vector<16x1xf32> to vector<16x256xf32>
    %127 = arith.addf %124, %126 : vector<16x256xf32>
    %128 = arith.addf %109, %127 : vector<16x256xf32>
    %c0_87 = arith.constant 0 : index
    %c0_88 = arith.constant 0 : index
    %129 = vector.load %arg12[%c0_87, %c0_88] : memref<16x256xf32, #tpu.memory_space<vmem>>, vector<16x256xf32>
    tpu.vector_store %arg12[%c0_87, %c0_88], %128 {strides = array<i32>} : memref<16x256xf32, #tpu.memory_space<vmem>>, vector<16x256xf32>,
    return
  }
}

</mosaic_0001>

<llo_original>
// kernel: tpu_custom_call.1
$region0: #{tpu_custom_call.1}
  #allocation0 [shape = 'u32[]', space=smem, size = 0x4, offset = 0x4, fixed_abs, tag = 'smem constant byte address 0x4 - core index']
  #allocation1 [shape = 'u32[144,128]{1,0:T(1,128)}', space=vmem, size = 0x12000, scoped, tag = 'internal scratch']
  #allocation2 [shape = 'f32[16,512]{1,0:T(8,128)}', space=vmem, size = 0x8000, scoped, tag = 'scratch operand']
  %s0 = inlined_call_operand.vmem [shape: f32[8,512], index: 0, kind: input, shape index: {}]
  %s1 = inlined_call_operand.vmem [shape: f32[1,256], index: 1, kind: input, shape index: {}]
  %s2 = inlined_call_operand.vmem [shape: bf16[16,88], index: 2, kind: input, shape index: {}]
  %s3 = inlined_call_operand.vmem [shape: f32[16,1], index: 3, kind: input, shape index: {}]
  %s4 = inlined_call_operand.vmem [shape: bf16[16,88], index: 4, kind: input, shape index: {}]
  %s5 = inlined_call_operand.vmem [shape: f32[16,1], index: 5, kind: input, shape index: {}]
  %s6 = inlined_call_operand.vmem [shape: f32[16,1], index: 6, kind: input, shape index: {}]
  %s7 = inlined_call_operand.vmem [shape: f32[16,1], index: 7, kind: input, shape index: {}]
  %s8 = inlined_call_operand.vmem [shape: bf16[16,176], index: 8, kind: input, shape index: {}]
  %s9 = inlined_call_operand.vmem [shape: f32[16,1], index: 9, kind: input, shape index: {}]
  %s10 = inlined_call_operand.vmem [shape: f32[16,1], index: 10, kind: input, shape index: {}]
  %s11 = inlined_call_operand.vmem [shape: f32[16,1], index: 11, kind: input, shape index: {}]
  %s12 = inlined_call_operand.hbm [shape: f32[16,256], index: 12, kind: output, shape index: {}]
  %s13 = sld [smem:[#allocation0]]
  $region58: #{tpu_custom_call.1} parent=0
    _
  %s15 = ssub.s32 1, %s13
  %s16 = scalar_select 0, %s15, %s13
  $region1: #{tpu_custom_call.1} parent=0
    #allocation3 [shape = 'u8[16384]{0}', space=vmem, size = 0x4000, scoped, tag = 'output window, operand 0, single buffered']
    #allocation4 [shape = 's32[1]{0}', space=sflag, size = 0x4, scoped, tag = 'scoped memory for tpu_custom_call.1']
    %17 = vsyncpa [#allocation4], 0
    // Predicated region
    $region2: #{tpu_custom_call.1} parent=1 // pred_check
      _
    $region3: #{tpu_custom_call.1} parent=1 // pred_check_branch
      %19 = sbr.rel (0) target = $region5
    $region4: #{tpu_custom_call.1} parent=1 // pred_region
      _
    $region5: #{tpu_custom_call.1} parent=1 // pred_fallthru
      _
    // Predicated region
    $region6: #{tpu_custom_call.1} parent=1 // pred_check
      _
    $region7: #{tpu_custom_call.1} parent=1 // pred_check_branch
      %21 = sbr.rel (0) target = $region9
    $region8: #{tpu_custom_call.1} parent=1 // pred_region
      _
    $region9: #{tpu_custom_call.1} parent=1 // pred_fallthru
      _
    // Predicated region
    $region10: #{tpu_custom_call.1} parent=1 // pred_check
      _
    $region11: #{tpu_custom_call.1} parent=1 // pred_check_branch
      %23 = sbr.rel (0) target = $region13
    $region12: #{tpu_custom_call.1} parent=1 // pred_region
      _
    $region13: #{tpu_custom_call.1} parent=1 // pred_fallthru
      _
    // Predicated region
    $region14: #{tpu_custom_call.1} parent=1 // pred_check
      _
    $region15: #{tpu_custom_call.1} parent=1 // pred_check_branch
      %25 = sbr.rel (0) target = $region17
    $region16: #{tpu_custom_call.1} parent=1 // pred_region
      _
    $region17: #{tpu_custom_call.1} parent=1 // pred_fallthru
      _
    // Predicated region
    $region18: #{tpu_custom_call.1} parent=1 // pred_check
      _
    $region19: #{tpu_custom_call.1} parent=1 // pred_check_branch
      %27 = sbr.rel (0) target = $region21
    $region20: #{tpu_custom_call.1} parent=1 // pred_region
      _
    $region21: #{tpu_custom_call.1} parent=1 // pred_fallthru
      _
    // Predicated region
    $region22: #{tpu_custom_call.1} parent=1 // pred_check
      _
    $region23: #{tpu_custom_call.1} parent=1 // pred_check_branch
      %29 = sbr.rel (0) target = $region25
    $region24: #{tpu_custom_call.1} parent=1 // pred_region
      _
    $region25: #{tpu_custom_call.1} parent=1 // pred_fallthru
      _
    // Predicated region
    $region26: #{tpu_custom_call.1} parent=1 // pred_check
      _
    $region27: #{tpu_custom_call.1} parent=1 // pred_check_branch
      %31 = sbr.rel (0) target = $region29
    $region28: #{tpu_custom_call.1} parent=1 // pred_region
      _
    $region29: #{tpu_custom_call.1} parent=1 // pred_fallthru
      _
    // Predicated region
    $region30: #{tpu_custom_call.1} parent=1 // pred_check
      _
    $region31: #{tpu_custom_call.1} parent=1 // pred_check_branch
      %33 = sbr.rel (0) target = $region33
    $region32: #{tpu_custom_call.1} parent=1 // pred_region
      _
    $region33: #{tpu_custom_call.1} parent=1 // pred_fallthru
      _
    // Predicated region
    $region34: #{tpu_custom_call.1} parent=1 // pred_check
      _
    $region35: #{tpu_custom_call.1} parent=1 // pred_check_branch
      %35 = sbr.rel (0) target = $region37
    $region36: #{tpu_custom_call.1} parent=1 // pred_region
      _
    $region37: #{tpu_custom_call.1} parent=1 // pred_fallthru
      _
    // Predicated region
    $region38: #{tpu_custom_call.1} parent=1 // pred_check
      _
    $region39: #{tpu_custom_call.1} parent=1 // pred_check_branch
      %37 = sbr.rel (0) target = $region41
    $region40: #{tpu_custom_call.1} parent=1 // pred_region
      _
    $region41: #{tpu_custom_call.1} parent=1 // pred_fallthru
      _
    // Predicated region
    $region42: #{tpu_custom_call.1} parent=1 // pred_check
      _
    $region43: #{tpu_custom_call.1} parent=1 // pred_check_branch
      %39 = sbr.rel (0) target = $region45
    $region44: #{tpu_custom_call.1} parent=1 // pred_region
      _
    $region45: #{tpu_custom_call.1} parent=1 // pred_fallthru
      _
    // Predicated region
    $region46: #{tpu_custom_call.1} parent=1 // pred_check
      _
    $region47: #{tpu_custom_call.1} parent=1 // pred_check_branch
      %41 = sbr.rel (0) target = $region49
    $region48: #{tpu_custom_call.1} parent=1 // pred_region
      _
    $region49: #{tpu_custom_call.1} parent=1 // pred_fallthru
      _
    %v43 = vld [vmem:[%s1] sm:$0x3]
    %v44 = vld [vmem:[%s4] sm:$0xf]
    %v45 = vld [vmem:[%s4 + $0x4] sm:$0xf]
    %v46 = vld [vmem:[%s0] sm:$0xff]
    %v47 = vld [vmem:[%s0 + $0x8] sm:$0xff]
    %v48 = vld [vmem:[%s0 + $0x10] sm:$0xff]
    %v49 = vld [vmem:[%s0 + $0x8] sm:$0xff]
    %v50 = vld [vmem:[%s0 + $0x10] sm:$0xff]
    %v51 = vld [vmem:[%s0 + $0x18] sm:$0xff]
    %55 = vrot.lane.b32.xlu0 %v46, 126
    %v56 = vpop.permute.xlu0 %55
    %57 = vrot.lane.b32.xlu0 %v47, 126
    %v58 = vpop.permute.xlu0 %57
    %59 = vrot.lane.b32.xlu0 %v48, 126
    %v60 = vpop.permute.xlu0 %59
    %vm61 = vcmask 1031168
    %v62 = vsel %vm61, %v56, %v58
    %v63 = vsel %vm61, %v58, %v60
    %67 = vrot.lane.b32.xlu0 %v46, 124
    %v68 = vpop.permute.xlu0 %67
    %69 = vrot.lane.b32.xlu0 %v47, 124
    %v70 = vpop.permute.xlu0 %69
    %71 = vrot.lane.b32.xlu0 %v48, 124
    %v72 = vpop.permute.xlu0 %71
    %vm73 = vcmask 1014784
    %v74 = vsel %vm73, %v68, %v70
    %v75 = vsel %vm73, %v70, %v72
    %79 = vrot.lane.b32.xlu0 %v46, 122
    %v80 = vpop.permute.xlu0 %79
    %81 = vrot.lane.b32.xlu0 %v47, 122
    %v82 = vpop.permute.xlu0 %81
    %83 = vrot.lane.b32.xlu0 %v48, 122
    %v84 = vpop.permute.xlu0 %83
    %vm85 = vcmask 998400
    %v86 = vsel %vm85, %v80, %v82
    %v87 = vsel %vm85, %v82, %v84
    %91 = vrot.lane.b32.xlu0 %v46, 120
    %v92 = vpop.permute.xlu0 %91
    %93 = vrot.lane.b32.xlu0 %v47, 120
    %v94 = vpop.permute.xlu0 %93
    %95 = vrot.lane.b32.xlu0 %v48, 120
    %v96 = vpop.permute.xlu0 %95
    %vm97 = vcmask 982016
    %v98 = vsel %vm97, %v92, %v94
    %v99 = vsel %vm97, %v94, %v96
    %103 = vrot.lane.b32.xlu0 %v47, 118
    %v104 = vpop.permute.xlu0 %103
    %105 = vrot.lane.b32.xlu0 %v48, 118
    %v106 = vpop.permute.xlu0 %105
    %vm107 = vcmask 965632
    %v108 = vsel %vm107, %v104, %v106
    %115 = vrot.lane.b32.xlu0 %v49, 116
    %v116 = vpop.permute.xlu0 %115
    %117 = vrot.lane.b32.xlu0 %v50, 116
    %v118 = vpop.permute.xlu0 %117
    %119 = vrot.lane.b32.xlu0 %v51, 116
    %v120 = vpop.permute.xlu0 %119
    %vm121 = vcmask 949248
    %v122 = vsel %vm121, %v116, %v118
    %v123 = vsel %vm121, %v118, %v120
    %127 = vrot.lane.b32.xlu0 %v49, 114
    %v128 = vpop.permute.xlu0 %127
    %129 = vrot.lane.b32.xlu0 %v50, 114
    %v130 = vpop.permute.xlu0 %129
    %131 = vrot.lane.b32.xlu0 %v51, 114
    %v132 = vpop.permute.xlu0 %131
    %vm133 = vcmask 932864
    %v134 = vsel %vm133, %v128, %v130
    %v135 = vsel %vm133, %v130, %v132
    %139 = vrot.lane.b32.xlu0 %v49, 112
    %v140 = vpop.permute.xlu0 %139
    %141 = vrot.lane.b32.xlu0 %v50, 112
    %v142 = vpop.permute.xlu0 %141
    %143 = vrot.lane.b32.xlu0 %v51, 112
    %v144 = vpop.permute.xlu0 %143
    %vm145 = vcmask 916480
    %v146 = vsel %vm145, %v140, %v142
    %v147 = vsel %vm145, %v142, %v144
    %151 = vrot.lane.b32.xlu0 %v49, 110
    %v152 = vpop.permute.xlu0 %151
    %153 = vrot.lane.b32.xlu0 %v50, 110
    %v154 = vpop.permute.xlu0 %153
    %155 = vrot.lane.b32.xlu0 %v51, 110
    %v156 = vpop.permute.xlu0 %155
    %vm157 = vcmask 900096
    %v158 = vsel %vm157, %v152, %v154
    %v159 = vsel %vm157, %v154, %v156
    %163 = vrot.lane.b32.xlu0 %v49, 108
    %v164 = vpop.permute.xlu0 %163
    %165 = vrot.lane.b32.xlu0 %v50, 108
    %v166 = vpop.permute.xlu0 %165
    %167 = vrot.lane.b32.xlu0 %v51, 108
    %v168 = vpop.permute.xlu0 %167
    %vm169 = vcmask 883712
    %v170 = vsel %vm169, %v164, %v166
    %v171 = vsel %vm169, %v166, %v168
    %v175 = vpack.c.bf16 %v62, %v46
    %v176 = vpack.c.bf16 %v63, %v47
    %v177 = vpack.c.bf16 %v60, %v48
    %v178 = vpack.c.bf16 %v86, %v74
    %v179 = vpack.c.bf16 %v87, %v75
    %v180 = vpack.c.bf16 %v84, %v72
    %v181 = vpack.c.bf16 %v104, %v98
    %v182 = vpack.c.bf16 %v108, %v99
    %v183 = vpack.c.bf16 %v106, %v96
    %v184 = vpack.c.bf16 %v128, %v116
    %v185 = vpack.c.bf16 %v134, %v122
    %v186 = vpack.c.bf16 %v135, %v123
    %v187 = vpack.c.bf16 %v152, %v140
    %v188 = vpack.c.bf16 %v158, %v146
    %v189 = vpack.c.bf16 %v159, %v147
    %v190 = vpack.c.bf16 %v164, %v164
    %v191 = vpack.c.bf16 %v170, %v170
    %v192 = vpack.c.bf16 %v171, %v171
    %v193 = vld [vmem:[%s5] sm:$0xff]
    %v194 = vld [vmem:[%s5 + $0x8] sm:$0xff]
    %196 = vset.pattern.permute.xlu0 0
    %197 = vperm.xlu0 %196, %v193
    %v198 = vpop.permute.xlu0 %197
    %201 = vset.pattern.permute.xlu0 0
    %202 = vperm.xlu0 %201, %v194
    %v203 = vpop.permute.xlu0 %202
    %v207 = vunpack.c.l.b16 %v44
    %v208 = vunpack.c.l.b16 %v45
    %v209 = vpack.c.b16 %v208, %v207
    %228 = vrot.lane.b32.xlu0 %v175, 10
    %v229 = vpop.permute.xlu0 %228
    %230 = vrot.lane.b32.xlu0 %v176, 10
    %v231 = vpop.permute.xlu0 %230
    %232 = vrot.lane.b32.xlu0 %v177, 10
    %v233 = vpop.permute.xlu0 %232
    %234 = vrot.lane.b32.xlu0 %v178, 10
    %v235 = vpop.permute.xlu0 %234
    %236 = vrot.lane.b32.xlu0 %v179, 10
    %v237 = vpop.permute.xlu0 %236
    %238 = vrot.lane.b32.xlu0 %v180, 10
    %v239 = vpop.permute.xlu0 %238
    %240 = vrot.lane.b32.xlu0 %v181, 10
    %v241 = vpop.permute.xlu0 %240
    %242 = vrot.lane.b32.xlu0 %v182, 10
    %v243 = vpop.permute.xlu0 %242
    %244 = vrot.lane.b32.xlu0 %v183, 10
    %v245 = vpop.permute.xlu0 %244
    %246 = vrot.lane.b32.xlu0 %v184, 10
    %v247 = vpop.permute.xlu0 %246
    %248 = vrot.lane.b32.xlu0 %v185, 10
    %v249 = vpop.permute.xlu0 %248
    %250 = vrot.lane.b32.xlu0 %v186, 10
    %v251 = vpop.permute.xlu0 %250
    %252 = vrot.lane.b32.xlu0 %v187, 10
    %v253 = vpop.permute.xlu0 %252
    %254 = vrot.lane.b32.xlu0 %v188, 10
    %v255 = vpop.permute.xlu0 %254
    %256 = vrot.lane.b32.xlu0 %v189, 10
    %v257 = vpop.permute.xlu0 %256
    %258 = vrot.lane.b32.xlu0 %v190, 10
    %v259 = vpop.permute.xlu0 %258
    %260 = vrot.lane.b32.xlu0 %v191, 10
    %v261 = vpop.permute.xlu0 %260
    %262 = vrot.lane.b32.xlu0 %v192, 10
    %v263 = vpop.permute.xlu0 %262
    %vm264 = vcmask 80896
    %v265 = vsel %vm264, %v229, %v231
    %v266 = vsel %vm264, %v231, %v233
    %v267 = vsel %vm264, %v235, %v237
    %v268 = vsel %vm264, %v237, %v239
    %v269 = vsel %vm264, %v241, %v243
    %v270 = vsel %vm264, %v243, %v245
    %v271 = vsel %vm264, %v247, %v249
    %v272 = vsel %vm264, %v249, %v251
    %v273 = vsel %vm264, %v253, %v255
    %v274 = vsel %vm264, %v255, %v257
    %v275 = vsel %vm264, %v259, %v261
    %v276 = vsel %vm264, %v261, %v263
    %vm287 = vcmask 719872
    %v289 = vsel %vm287, %v209, 0
    %vm291 = vcmask 1043456
    %v293 = vsel %vm291, %v275, 0
    %v296 = vsel %vm291, %v276, 0
    %298 = vmatprep.subr.bf16.mxu0 %v266
    %299 = vmatpush1.bf16.msra.mxu0 %v265
    %300 = vmatprep.subr.bf16.mxu0 %v268
    %301 = vmatpush1.bf16.msra.mxu0 %v267
    %302 = vmatprep.subr.bf16.mxu0 %v270
    %303 = vmatpush1.bf16.msra.mxu0 %v269
    %304 = vmatprep.subr.bf16.mxu0 %v272
    %305 = vmatpush1.bf16.msra.mxu0 %v271
    %306 = vmatprep.subr.bf16.mxu0 %v274
    %307 = vmatpush1.bf16.msra.mxu0 %v273
    %308 = vmatprep.subr.bf16.mxu0 %v296
    %309 = vmatpush1.bf16.msra.mxu0 %v293
    %310 = vmatprep.subr.bf16.mxu0 0
    %311 = vmatpush1.bf16.msra.mxu0 0
    %312 = vmatprep.subr.bf16.mxu0 0
    %313 = vmatpush1.bf16.msra.mxu0 0
    %314 = vmatprep.subr.bf16.mxu0 0
    %315 = vmatpush1.bf16.msra.mxu0 0
    %316 = vmatprep.subr.bf16.mxu0 0
    %317 = vmatpush1.bf16.msra.mxu0 0
    %318 = vmatprep.subr.bf16.mxu0 0
    %319 = vmatpush1.bf16.msra.mxu0 0
    %320 = vmatprep.subr.bf16.mxu0 0
    %321 = vmatpush1.bf16.msra.mxu0 0
    %322 = vmatprep.subr.bf16.mxu0 0
    %323 = vmatpush1.bf16.msra.mxu0 0
    %324 = vmatprep.subr.bf16.mxu0 0
    %325 = vmatpush1.bf16.msra.mxu0 0
    %326 = vmatprep.subr.bf16.mxu0 0
    %327 = vmatpush1.bf16.msra.mxu0 0
    %328 = vmatprep.subr.bf16.mxu0 0
    %329 = vmatpush1.bf16.msra.mxu0 0
    %330 = vmatprep.mubr.bf16.mxu0 0
    %331 = vmatmul.mubr.bf16.gmra.mrb[0].mxu0 %v289
    %v332 = vpop.f32.mrb[0].mxu0
    %v333 = vadd.f32 %v198, %v332
    %v334 = vpop.f32.mrb[0].mxu0
    %v335 = vadd.f32 %v198, %v334
    %v336 = vpop.f32.mrb[0].mxu0
    %v337 = vadd.f32 %v203, %v336
    %v338 = vpop.f32.mrb[0].mxu0
    %v339 = vadd.f32 %v203, %v338
    %340 = vdwg.mxu0
    %v341 = vld [vmem:[%s6] sm:$0xff]
    %v342 = vld [vmem:[%s6 + $0x8] sm:$0xff]
    %v343 = vld [vmem:[%s7] sm:$0xff]
    %v344 = vld [vmem:[%s7 + $0x8] sm:$0xff]
    %v346 = vlaneseq
    %v347 = vshrl.u32 %v346, 7
    %v348 = vsub.s32 0, %v347
    %v349 = vrot.slane %v43, %v348
    %v350 = vlaneseq
    %v351 = vshrl.u32 %v350, 7
    %v352 = vsub.s32 1, %v351
    %v353 = vrot.slane %v43, %v352
    %v356 = vmul.f32 %v333, %v349
    %v357 = vmul.f32 %v335, %v353
    %v358 = vmul.f32 %v337, %v349
    %v359 = vmul.f32 %v339, %v353
    %v360 = vadd.f32 %v356, %v357
    %361 = vadd.xlane.f32.xlu0 %v360
    %v362 = vpop.xlane.xlu0 %361
    %v363 = vadd.f32 %v358, %v359
    %364 = vadd.xlane.f32.xlu0 %v363
    %v365 = vpop.xlane.xlu0 %364
    %v366 = vmul.f32 %v362, 0.0078125
    %v367 = vmul.f32 %v365, 0.0078125
    %v368 = vsub.f32 %v333, %v366
    %v369 = vsub.f32 %v335, %v366
    %v370 = vsub.f32 %v337, %v367
    %v371 = vsub.f32 %v339, %v367
    %v372 = vmul.f32 %v368, %v368
    %v373 = vmul.f32 %v369, %v369
    %v374 = vmul.f32 %v370, %v370
    %v375 = vmul.f32 %v371, %v371
    %v376 = vmul.f32 %v372, %v349
    %v377 = vmul.f32 %v373, %v353
    %v378 = vmul.f32 %v374, %v349
    %v379 = vmul.f32 %v375, %v353
    %v380 = vadd.f32 %v376, %v377
    %381 = vadd.xlane.f32.xlu0 %v380
    %v382 = vpop.xlane.xlu0 %381
    %v383 = vadd.f32 %v378, %v379
    %384 = vadd.xlane.f32.xlu0 %v383
    %v385 = vpop.xlane.xlu0 %384
    %v386 = vmul.f32 %v382, 0.0078125
    %v387 = vmul.f32 %v385, 0.0078125
    %v388 = vadd.f32 %v386, 1e-05
    %v389 = vadd.f32 %v387, 1e-05
    %v390 = vrsqrt.pop %v388
    %v391 = vrsqrt.pop %v389
    %v392 = vmul.f32 %v368, %v390
    %v393 = vmul.f32 %v369, %v390
    %v394 = vmul.f32 %v370, %v391
    %v395 = vmul.f32 %v371, %v391
    %397 = vset.pattern.permute.xlu0 0
    %398 = vperm.xlu0 %397, %v341
    %v399 = vpop.permute.xlu0 %398
    %402 = vset.pattern.permute.xlu0 0
    %403 = vperm.xlu0 %402, %v342
    %v404 = vpop.permute.xlu0 %403
    %v406 = vmul.f32 %v392, %v399
    %v407 = vmul.f32 %v393, %v399
    %v408 = vmul.f32 %v394, %v404
    %v409 = vmul.f32 %v395, %v404
    %411 = vset.pattern.permute.xlu0 0
    %412 = vperm.xlu0 %411, %v343
    %v413 = vpop.permute.xlu0 %412
    %416 = vset.pattern.permute.xlu0 0
    %417 = vperm.xlu0 %416, %v344
    %v418 = vpop.permute.xlu0 %417
    %v420 = vadd.f32 %v406, %v413
    %v421 = vadd.f32 %v407, %v413
    %v422 = vadd.f32 %v408, %v418
    %v423 = vadd.f32 %v409, %v418
    %vm424 = vcmp.ge.f32.partialorder %v420, 0.0
    %vm425 = vcmp.ge.f32.partialorder %v421, 0.0
    %vm426 = vcmp.ge.f32.partialorder %v422, 0.0
    %vm427 = vcmp.ge.f32.partialorder %v423, 0.0
    %v428 = vmul.f32 %v420, 0.2
    %v429 = vmul.f32 %v421, 0.2
    %v430 = vmul.f32 %v422, 0.2
    %v431 = vmul.f32 %v423, 0.2
    %v432 = vsel %vm424, %v420, %v428
    %v433 = vsel %vm425, %v421, %v429
    %v434 = vsel %vm426, %v422, %v430
    %v435 = vsel %vm427, %v423, %v431
    %v436 = vmul.f32 %v432, %v349
    %v437 = vmul.f32 %v433, %v353
    %v438 = vmul.f32 %v434, %v349
    %v439 = vmul.f32 %v435, %v353
    %440 = vst [vmem:[#allocation2] sm:$0xff] 0.0
    %441 = vst [vmem:[#allocation2 + $0x20] sm:$0xff] 0.0
    %442 = vst [vmem:[#allocation2 + $0x18] sm:$0xff] 0.0
    %443 = vst [vmem:[#allocation2 + $0x38] sm:$0xff] 0.0
    %444 = vst [vmem:[#allocation2 + $0x8] sm:$0xff] %v436
    %445 = vst [vmem:[#allocation2 + $0x10] sm:$0xff] %v437
    %446 = vst [vmem:[#allocation2 + $0x28] sm:$0xff] %v438
    %447 = vst [vmem:[#allocation2 + $0x30] sm:$0xff] %v439
    %v448 = vld [vmem:[%s8] sm:$0xff]
    %v449 = vld [vmem:[%s8 + $0x8] sm:$0xff]
    %v450 = vld [vmem:[#allocation2] sm:$0xff]
    %v451 = vld [vmem:[#allocation2 + $0x8] sm:$0xff]
    %v452 = vld [vmem:[#allocation2 + $0x10] sm:$0xff]
    %v453 = vld [vmem:[#allocation2 + $0x20] sm:$0xff]
    %v454 = vld [vmem:[#allocation2 + $0x28] sm:$0xff]
    %v455 = vld [vmem:[#allocation2 + $0x30] sm:$0xff]
    %v456 = vld [vmem:[#allocation2 + $0x8] sm:$0xff]
    %v457 = vld [vmem:[#allocation2 + $0x10] sm:$0xff]
    %v458 = vld [vmem:[#allocation2 + $0x18] sm:$0xff]
    %v459 = vld [vmem:[#allocation2 + $0x28] sm:$0xff]
    %v460 = vld [vmem:[#allocation2 + $0x30] sm:$0xff]
    %v461 = vld [vmem:[#allocation2 + $0x38] sm:$0xff]
    %468 = vrot.lane.b32.xlu0 %v450, 124
    %v469 = vpop.permute.xlu0 %468
    %470 = vrot.lane.b32.xlu0 %v451, 124
    %v471 = vpop.permute.xlu0 %470
    %472 = vrot.lane.b32.xlu0 %v452, 124
    %v473 = vpop.permute.xlu0 %472
    %474 = vrot.lane.b32.xlu0 %v453, 124
    %v475 = vpop.permute.xlu0 %474
    %476 = vrot.lane.b32.xlu0 %v454, 124
    %v477 = vpop.permute.xlu0 %476
    %478 = vrot.lane.b32.xlu0 %v455, 124
    %v479 = vpop.permute.xlu0 %478
    %v480 = vsel %vm73, %v469, %v471
    %v481 = vsel %vm73, %v471, %v473
    %v482 = vsel %vm73, %v475, %v477
    %v483 = vsel %vm73, %v477, %v479
    %490 = vrot.lane.b32.xlu0 %v450, 120
    %v491 = vpop.permute.xlu0 %490
    %492 = vrot.lane.b32.xlu0 %v451, 120
    %v493 = vpop.permute.xlu0 %492
    %494 = vrot.lane.b32.xlu0 %v452, 120
    %v495 = vpop.permute.xlu0 %494
    %496 = vrot.lane.b32.xlu0 %v453, 120
    %v497 = vpop.permute.xlu0 %496
    %498 = vrot.lane.b32.xlu0 %v454, 120
    %v499 = vpop.permute.xlu0 %498
    %500 = vrot.lane.b32.xlu0 %v455, 120
    %v501 = vpop.permute.xlu0 %500
    %v502 = vsel %vm97, %v491, %v493
    %v503 = vsel %vm97, %v493, %v495
    %v504 = vsel %vm97, %v497, %v499
    %v505 = vsel %vm97, %v499, %v501
    %512 = vrot.lane.b32.xlu0 %v450, 116
    %v513 = vpop.permute.xlu0 %512
    %514 = vrot.lane.b32.xlu0 %v451, 116
    %v515 = vpop.permute.xlu0 %514
    %516 = vrot.lane.b32.xlu0 %v452, 116
    %v517 = vpop.permute.xlu0 %516
    %518 = vrot.lane.b32.xlu0 %v453, 116
    %v519 = vpop.permute.xlu0 %518
    %520 = vrot.lane.b32.xlu0 %v454, 116
    %v521 = vpop.permute.xlu0 %520
    %522 = vrot.lane.b32.xlu0 %v455, 116
    %v523 = vpop.permute.xlu0 %522
    %v524 = vsel %vm121, %v513, %v515
    %v525 = vsel %vm121, %v515, %v517
    %v526 = vsel %vm121, %v519, %v521
    %v527 = vsel %vm121, %v521, %v523
    %534 = vrot.lane.b32.xlu0 %v450, 112
    %v535 = vpop.permute.xlu0 %534
    %536 = vrot.lane.b32.xlu0 %v451, 112
    %v537 = vpop.permute.xlu0 %536
    %538 = vrot.lane.b32.xlu0 %v452, 112
    %v539 = vpop.permute.xlu0 %538
    %540 = vrot.lane.b32.xlu0 %v453, 112
    %v541 = vpop.permute.xlu0 %540
    %542 = vrot.lane.b32.xlu0 %v454, 112
    %v543 = vpop.permute.xlu0 %542
    %544 = vrot.lane.b32.xlu0 %v455, 112
    %v545 = vpop.permute.xlu0 %544
    %v546 = vsel %vm145, %v535, %v537
    %v547 = vsel %vm145, %v537, %v539
    %v548 = vsel %vm145, %v541, %v543
    %v549 = vsel %vm145, %v543, %v545
    %556 = vrot.lane.b32.xlu0 %v451, 108
    %v557 = vpop.permute.xlu0 %556
    %558 = vrot.lane.b32.xlu0 %v452, 108
    %v559 = vpop.permute.xlu0 %558
    %560 = vrot.lane.b32.xlu0 %v454, 108
    %v561 = vpop.permute.xlu0 %560
    %562 = vrot.lane.b32.xlu0 %v455, 108
    %v563 = vpop.permute.xlu0 %562
    %v564 = vsel %vm169, %v557, %v559
    %v565 = vsel %vm169, %v561, %v563
    %578 = vrot.lane.b32.xlu0 %v456, 104
    %v579 = vpop.permute.xlu0 %578
    %580 = vrot.lane.b32.xlu0 %v457, 104
    %v581 = vpop.permute.xlu0 %580
    %582 = vrot.lane.b32.xlu0 %v458, 104
    %v583 = vpop.permute.xlu0 %582
    %584 = vrot.lane.b32.xlu0 %v459, 104
    %v585 = vpop.permute.xlu0 %584
    %586 = vrot.lane.b32.xlu0 %v460, 104
    %v587 = vpop.permute.xlu0 %586
    %588 = vrot.lane.b32.xlu0 %v461, 104
    %v589 = vpop.permute.xlu0 %588
    %vm590 = vcmask 850944
    %v591 = vsel %vm590, %v579, %v581
    %v592 = vsel %vm590, %v581, %v583
    %v593 = vsel %vm590, %v585, %v587
    %v594 = vsel %vm590, %v587, %v589
    %601 = vrot.lane.b32.xlu0 %v456, 100
    %v602 = vpop.permute.xlu0 %601
    %603 = vrot.lane.b32.xlu0 %v457, 100
    %v604 = vpop.permute.xlu0 %603
    %605 = vrot.lane.b32.xlu0 %v458, 100
    %v606 = vpop.permute.xlu0 %605
    %607 = vrot.lane.b32.xlu0 %v459, 100
    %v608 = vpop.permute.xlu0 %607
    %609 = vrot.lane.b32.xlu0 %v460, 100
    %v610 = vpop.permute.xlu0 %609
    %611 = vrot.lane.b32.xlu0 %v461, 100
    %v612 = vpop.permute.xlu0 %611
    %vm613 = vcmask 818176
    %v614 = vsel %vm613, %v602, %v604
    %v615 = vsel %vm613, %v604, %v606
    %v616 = vsel %vm613, %v608, %v610
    %v617 = vsel %vm613, %v610, %v612
    %624 = vrot.lane.b32.xlu0 %v456, 96
    %v625 = vpop.permute.xlu0 %624
    %626 = vrot.lane.b32.xlu0 %v457, 96
    %v627 = vpop.permute.xlu0 %626
    %628 = vrot.lane.b32.xlu0 %v458, 96
    %v629 = vpop.permute.xlu0 %628
    %630 = vrot.lane.b32.xlu0 %v459, 96
    %v631 = vpop.permute.xlu0 %630
    %632 = vrot.lane.b32.xlu0 %v460, 96
    %v633 = vpop.permute.xlu0 %632
    %634 = vrot.lane.b32.xlu0 %v461, 96
    %v635 = vpop.permute.xlu0 %634
    %vm636 = vcmask 785408
    %v637 = vsel %vm636, %v625, %v627
    %v638 = vsel %vm636, %v627, %v629
    %v639 = vsel %vm636, %v631, %v633
    %v640 = vsel %vm636, %v633, %v635
    %647 = vrot.lane.b32.xlu0 %v456, 92
    %v648 = vpop.permute.xlu0 %647
    %649 = vrot.lane.b32.xlu0 %v457, 92
    %v650 = vpop.permute.xlu0 %649
    %651 = vrot.lane.b32.xlu0 %v458, 92
    %v652 = vpop.permute.xlu0 %651
    %653 = vrot.lane.b32.xlu0 %v459, 92
    %v654 = vpop.permute.xlu0 %653
    %655 = vrot.lane.b32.xlu0 %v460, 92
    %v656 = vpop.permute.xlu0 %655
    %657 = vrot.lane.b32.xlu0 %v461, 92
    %v658 = vpop.permute.xlu0 %657
    %vm659 = vcmask 752640
    %v660 = vsel %vm659, %v648, %v650
    %v661 = vsel %vm659, %v650, %v652
    %v662 = vsel %vm659, %v654, %v656
    %v663 = vsel %vm659, %v656, %v658
    %670 = vrot.lane.b32.xlu0 %v456, 88
    %v671 = vpop.permute.xlu0 %670
    %672 = vrot.lane.b32.xlu0 %v457, 88
    %v673 = vpop.permute.xlu0 %672
    %674 = vrot.lane.b32.xlu0 %v458, 88
    %v675 = vpop.permute.xlu0 %674
    %676 = vrot.lane.b32.xlu0 %v459, 88
    %v677 = vpop.permute.xlu0 %676
    %678 = vrot.lane.b32.xlu0 %v460, 88
    %v679 = vpop.permute.xlu0 %678
    %680 = vrot.lane.b32.xlu0 %v461, 88
    %v681 = vpop.permute.xlu0 %680
    %v682 = vsel %vm287, %v671, %v673
    %v683 = vsel %vm287, %v673, %v675
    %v684 = vsel %vm287, %v677, %v679
    %v685 = vsel %vm287, %v679, %v681
    %v692 = vpack.c.bf16 %v453, %v450
    %v693 = vpack.c.bf16 %v454, %v451
    %v694 = vpack.c.bf16 %v455, %v452
    %v695 = vpack.c.bf16 %v482, %v480
    %v696 = vpack.c.bf16 %v483, %v481
    %v697 = vpack.c.bf16 %v479, %v473
    %v698 = vpack.c.bf16 %v504, %v502
    %v699 = vpack.c.bf16 %v505, %v503
    %v700 = vpack.c.bf16 %v501, %v495
    %v701 = vpack.c.bf16 %v526, %v524
    %v702 = vpack.c.bf16 %v527, %v525
    %v703 = vpack.c.bf16 %v523, %v517
    %v704 = vpack.c.bf16 %v548, %v546
    %v705 = vpack.c.bf16 %v549, %v547
    %v706 = vpack.c.bf16 %v545, %v539
    %v707 = vpack.c.bf16 %v561, %v557
    %v708 = vpack.c.bf16 %v565, %v564
    %v709 = vpack.c.bf16 %v563, %v559
    %v710 = vpack.c.bf16 %v585, %v579
    %v711 = vpack.c.bf16 %v593, %v591
    %v712 = vpack.c.bf16 %v594, %v592
    %v713 = vpack.c.bf16 %v608, %v602
    %v714 = vpack.c.bf16 %v616, %v614
    %v715 = vpack.c.bf16 %v617, %v615
    %v716 = vpack.c.bf16 %v631, %v625
    %v717 = vpack.c.bf16 %v639, %v637
    %v718 = vpack.c.bf16 %v640, %v638
    %v719 = vpack.c.bf16 %v654, %v648
    %v720 = vpack.c.bf16 %v662, %v660
    %v721 = vpack.c.bf16 %v663, %v661
    %v722 = vpack.c.bf16 %v677, %v671
    %v723 = vpack.c.bf16 %v684, %v682
    %v724 = vpack.c.bf16 %v685, %v683
    %v725 = vld [vmem:[%s9] sm:$0xff]
    %v726 = vld [vmem:[%s9 + $0x8] sm:$0xff]
    %728 = vset.pattern.permute.xlu0 0
    %729 = vperm.xlu0 %728, %v725
    %v730 = vpop.permute.xlu0 %729
    %733 = vset.pattern.permute.xlu0 0
    %734 = vperm.xlu0 %733, %v726
    %v735 = vpop.permute.xlu0 %734
    %v739 = vunpack.c.l.b16 %v448
    %v740 = vunpack.c.h.b16 %v448
    %v741 = vunpack.c.l.b16 %v449
    %v742 = vunpack.c.h.b16 %v449
    %v743 = vpack.c.b16 %v741, %v739
    %v744 = vpack.c.b16 %v742, %v740
    %779 = vrot.lane.b32.xlu0 %v692, 20
    %v780 = vpop.permute.xlu0 %779
    %781 = vrot.lane.b32.xlu0 %v693, 20
    %v782 = vpop.permute.xlu0 %781
    %783 = vrot.lane.b32.xlu0 %v694, 20
    %v784 = vpop.permute.xlu0 %783
    %785 = vrot.lane.b32.xlu0 %v695, 20
    %v786 = vpop.permute.xlu0 %785
    %787 = vrot.lane.b32.xlu0 %v696, 20
    %v788 = vpop.permute.xlu0 %787
    %789 = vrot.lane.b32.xlu0 %v697, 20
    %v790 = vpop.permute.xlu0 %789
    %791 = vrot.lane.b32.xlu0 %v698, 20
    %v792 = vpop.permute.xlu0 %791
    %793 = vrot.lane.b32.xlu0 %v699, 20
    %v794 = vpop.permute.xlu0 %793
    %795 = vrot.lane.b32.xlu0 %v700, 20
    %v796 = vpop.permute.xlu0 %795
    %797 = vrot.lane.b32.xlu0 %v701, 20
    %v798 = vpop.permute.xlu0 %797
    %799 = vrot.lane.b32.xlu0 %v702, 20
    %v800 = vpop.permute.xlu0 %799
    %801 = vrot.lane.b32.xlu0 %v703, 20
    %v802 = vpop.permute.xlu0 %801
    %803 = vrot.lane.b32.xlu0 %v704, 20
    %v804 = vpop.permute.xlu0 %803
    %805 = vrot.lane.b32.xlu0 %v705, 20
    %v806 = vpop.permute.xlu0 %805
    %807 = vrot.lane.b32.xlu0 %v706, 20
    %v808 = vpop.permute.xlu0 %807
    %809 = vrot.lane.b32.xlu0 %v707, 20
    %v810 = vpop.permute.xlu0 %809
    %811 = vrot.lane.b32.xlu0 %v708, 20
    %v812 = vpop.permute.xlu0 %811
    %813 = vrot.lane.b32.xlu0 %v709, 20
    %v814 = vpop.permute.xlu0 %813
    %815 = vrot.lane.b32.xlu0 %v710, 20
    %v816 = vpop.permute.xlu0 %815
    %817 = vrot.lane.b32.xlu0 %v711, 20
    %v818 = vpop.permute.xlu0 %817
    %819 = vrot.lane.b32.xlu0 %v712, 20
    %v820 = vpop.permute.xlu0 %819
    %821 = vrot.lane.b32.xlu0 %v713, 20
    %v822 = vpop.permute.xlu0 %821
    %823 = vrot.lane.b32.xlu0 %v714, 20
    %v824 = vpop.permute.xlu0 %823
    %825 = vrot.lane.b32.xlu0 %v715, 20
    %v826 = vpop.permute.xlu0 %825
    %827 = vrot.lane.b32.xlu0 %v716, 20
    %v828 = vpop.permute.xlu0 %827
    %829 = vrot.lane.b32.xlu0 %v717, 20
    %v830 = vpop.permute.xlu0 %829
    %831 = vrot.lane.b32.xlu0 %v718, 20
    %v832 = vpop.permute.xlu0 %831
    %833 = vrot.lane.b32.xlu0 %v719, 20
    %v834 = vpop.permute.xlu0 %833
    %835 = vrot.lane.b32.xlu0 %v720, 20
    %v836 = vpop.permute.xlu0 %835
    %837 = vrot.lane.b32.xlu0 %v721, 20
    %v838 = vpop.permute.xlu0 %837
    %839 = vrot.lane.b32.xlu0 %v722, 20
    %v840 = vpop.permute.xlu0 %839
    %841 = vrot.lane.b32.xlu0 %v723, 20
    %v842 = vpop.permute.xlu0 %841
    %843 = vrot.lane.b32.xlu0 %v724, 20
    %v844 = vpop.permute.xlu0 %843
    %vm845 = vcmask 162816
    %v846 = vsel %vm845, %v780, %v782
    %v847 = vsel %vm845, %v782, %v784
    %v848 = vsel %vm845, %v786, %v788
    %v849 = vsel %vm845, %v788, %v790
    %v850 = vsel %vm845, %v792, %v794
    %v851 = vsel %vm845, %v794, %v796
    %v852 = vsel %vm845, %v798, %v800
    %v853 = vsel %vm845, %v800, %v802
    %v854 = vsel %vm845, %v804, %v806
    %v855 = vsel %vm845, %v806, %v808
    %v856 = vsel %vm845, %v810, %v812
    %v857 = vsel %vm845, %v812, %v814
    %v858 = vsel %vm845, %v816, %v818
    %v859 = vsel %vm845, %v818, %v820
    %v860 = vsel %vm845, %v822, %v824
    %v861 = vsel %vm845, %v824, %v826
    %v862 = vsel %vm845, %v828, %v830
    %v863 = vsel %vm845, %v830, %v832
    %v864 = vsel %vm845, %v834, %v836
    %v865 = vsel %vm845, %v836, %v838
    %v866 = vsel %vm845, %v840, %v842
    %v867 = vsel %vm845, %v842, %v844
    %vm890 = vcmask 392192
    %v892 = vsel %vm890, %v744, 0
    %894 = vmatprep.subr.bf16.mxu0 %v847
    %895 = vmatpush1.bf16.msra.mxu0 %v846
    %896 = vmatprep.subr.bf16.mxu0 %v849
    %897 = vmatpush1.bf16.msra.mxu0 %v848
    %898 = vmatprep.subr.bf16.mxu0 %v851
    %899 = vmatpush1.bf16.msra.mxu0 %v850
    %900 = vmatprep.subr.bf16.mxu0 %v853
    %901 = vmatpush1.bf16.msra.mxu0 %v852
    %902 = vmatprep.subr.bf16.mxu0 %v855
    %903 = vmatpush1.bf16.msra.mxu0 %v854
    %904 = vmatprep.subr.bf16.mxu0 %v857
    %905 = vmatpush1.bf16.msra.mxu0 %v856
    %906 = vmatprep.subr.bf16.mxu0 %v859
    %907 = vmatpush1.bf16.msra.mxu0 %v858
    %908 = vmatprep.subr.bf16.mxu0 %v861
    %909 = vmatpush1.bf16.msra.mxu0 %v860
    %910 = vmatprep.subr.bf16.mxu0 %v863
    %911 = vmatpush1.bf16.msra.mxu0 %v862
    %912 = vmatprep.subr.bf16.mxu0 %v865
    %913 = vmatpush1.bf16.msra.mxu0 %v864
    %914 = vmatprep.subr.bf16.mxu0 %v867
    %915 = vmatpush1.bf16.msra.mxu0 %v866
    %916 = vmatprep.subr.bf16.mxu0 0
    %917 = vmatpush1.bf16.msra.mxu0 0
    %918 = vmatprep.subr.bf16.mxu0 0
    %919 = vmatpush1.bf16.msra.mxu0 0
    %920 = vmatprep.subr.bf16.mxu0 0
    %921 = vmatpush1.bf16.msra.mxu0 0
    %922 = vmatprep.subr.bf16.mxu0 0
    %923 = vmatpush1.bf16.msra.mxu0 0
    %924 = vmatprep.subr.bf16.mxu0 0
    %925 = vmatpush1.bf16.msra.mxu0 0
    %926 = vmatprep.mubr.bf16.mxu0 %v892
    %927 = vmatmul.mubr.bf16.gmra.mrb[0].mxu0 %v743
    %v928 = vpop.f32.mrb[0].mxu0
    %v929 = vadd.f32 %v730, %v928
    %v930 = vpop.f32.mrb[0].mxu0
    %v931 = vadd.f32 %v730, %v930
    %v932 = vpop.f32.mrb[0].mxu0
    %v933 = vadd.f32 %v735, %v932
    %v934 = vpop.f32.mrb[0].mxu0
    %v935 = vadd.f32 %v735, %v934
    %936 = vdwg.mxu0
    %v937 = vld [vmem:[%s10] sm:$0xff]
    %v938 = vld [vmem:[%s10 + $0x8] sm:$0xff]
    %v939 = vld [vmem:[%s11] sm:$0xff]
    %v940 = vld [vmem:[%s11 + $0x8] sm:$0xff]
    %v941 = vmul.f32 %v929, %v349
    %v942 = vmul.f32 %v931, %v353
    %v943 = vmul.f32 %v933, %v349
    %v944 = vmul.f32 %v935, %v353
    %v945 = vadd.f32 %v941, %v942
    %946 = vadd.xlane.f32.xlu0 %v945
    %v947 = vpop.xlane.xlu0 %946
    %v948 = vadd.f32 %v943, %v944
    %949 = vadd.xlane.f32.xlu0 %v948
    %v950 = vpop.xlane.xlu0 %949
    %v951 = vmul.f32 %v947, 0.0078125
    %v952 = vmul.f32 %v950, 0.0078125
    %v953 = vsub.f32 %v929, %v951
    %v954 = vsub.f32 %v931, %v951
    %v955 = vsub.f32 %v933, %v952
    %v956 = vsub.f32 %v935, %v952
    %v957 = vmul.f32 %v953, %v953
    %v958 = vmul.f32 %v954, %v954
    %v959 = vmul.f32 %v955, %v955
    %v960 = vmul.f32 %v956, %v956
    %v961 = vmul.f32 %v957, %v349
    %v962 = vmul.f32 %v958, %v353
    %v963 = vmul.f32 %v959, %v349
    %v964 = vmul.f32 %v960, %v353
    %v965 = vadd.f32 %v961, %v962
    %966 = vadd.xlane.f32.xlu0 %v965
    %v967 = vpop.xlane.xlu0 %966
    %v968 = vadd.f32 %v963, %v964
    %969 = vadd.xlane.f32.xlu0 %v968
    %v970 = vpop.xlane.xlu0 %969
    %v971 = vmul.f32 %v967, 0.0078125
    %v972 = vmul.f32 %v970, 0.0078125
    %v973 = vadd.f32 %v971, 1e-05
    %v974 = vadd.f32 %v972, 1e-05
    %v975 = vrsqrt.pop %v973
    %v976 = vrsqrt.pop %v974
    %v977 = vmul.f32 %v953, %v975
    %v978 = vmul.f32 %v954, %v975
    %v979 = vmul.f32 %v955, %v976
    %v980 = vmul.f32 %v956, %v976
    %982 = vset.pattern.permute.xlu0 0
    %983 = vperm.xlu0 %982, %v937
    %v984 = vpop.permute.xlu0 %983
    %987 = vset.pattern.permute.xlu0 0
    %988 = vperm.xlu0 %987, %v938
    %v989 = vpop.permute.xlu0 %988
    %v991 = vmul.f32 %v977, %v984
    %v992 = vmul.f32 %v978, %v984
    %v993 = vmul.f32 %v979, %v989
    %v994 = vmul.f32 %v980, %v989
    %996 = vset.pattern.permute.xlu0 0
    %997 = vperm.xlu0 %996, %v939
    %v998 = vpop.permute.xlu0 %997
    %1001 = vset.pattern.permute.xlu0 0
    %1002 = vperm.xlu0 %1001, %v940
    %v1003 = vpop.permute.xlu0 %1002
    %v1005 = vadd.f32 %v991, %v998
    %v1006 = vadd.f32 %v992, %v998
    %v1007 = vadd.f32 %v993, %v1003
    %v1008 = vadd.f32 %v994, %v1003
    %vm1009 = vcmp.ge.f32.partialorder %v1005, 0.0
    %vm1010 = vcmp.ge.f32.partialorder %v1006, 0.0
    %vm1011 = vcmp.ge.f32.partialorder %v1007, 0.0
    %vm1012 = vcmp.ge.f32.partialorder %v1008, 0.0
    %v1013 = vmul.f32 %v1005, 0.2
    %v1014 = vmul.f32 %v1006, 0.2
    %v1015 = vmul.f32 %v1007, 0.2
    %v1016 = vmul.f32 %v1008, 0.2
    %v1017 = vsel %vm1009, %v1005, %v1013
    %v1018 = vsel %vm1010, %v1006, %v1014
    %v1019 = vsel %vm1011, %v1007, %v1015
    %v1020 = vsel %vm1012, %v1008, %v1016
    %v1021 = vld [vmem:[%s2] sm:$0xf]
    %v1022 = vld [vmem:[%s2 + $0x4] sm:$0xf]
    %v1023 = vld [vmem:[%s0] sm:$0xff]
    %v1024 = vld [vmem:[%s0 + $0x8] sm:$0xff]
    %v1025 = vld [vmem:[%s0 + $0x10] sm:$0xff]
    %v1026 = vld [vmem:[%s0 + $0x8] sm:$0xff]
    %v1027 = vld [vmem:[%s0 + $0x10] sm:$0xff]
    %v1028 = vld [vmem:[%s0 + $0x18] sm:$0xff]
    %1032 = vrot.lane.b32.xlu0 %v1023, 127
    %v1033 = vpop.permute.xlu0 %1032
    %1034 = vrot.lane.b32.xlu0 %v1024, 127
    %v1035 = vpop.permute.xlu0 %1034
    %1036 = vrot.lane.b32.xlu0 %v1025, 127
    %v1037 = vpop.permute.xlu0 %1036
    %vm1038 = vcmask 1039360
    %v1039 = vsel %vm1038, %v1033, %v1035
    %v1040 = vsel %vm1038, %v1035, %v1037
    %1044 = vrot.lane.b32.xlu0 %v1023, 126
    %v1045 = vpop.permute.xlu0 %1044
    %1046 = vrot.lane.b32.xlu0 %v1024, 126
    %v1047 = vpop.permute.xlu0 %1046
    %1048 = vrot.lane.b32.xlu0 %v1025, 126
    %v1049 = vpop.permute.xlu0 %1048
    %v1050 = vsel %vm61, %v1045, %v1047
    %v1051 = vsel %vm61, %v1047, %v1049
    %1055 = vrot.lane.b32.xlu0 %v1023, 125
    %v1056 = vpop.permute.xlu0 %1055
    %1057 = vrot.lane.b32.xlu0 %v1024, 125
    %v1058 = vpop.permute.xlu0 %1057
    %1059 = vrot.lane.b32.xlu0 %v1025, 125
    %v1060 = vpop.permute.xlu0 %1059
    %vm1061 = vcmask 1022976
    %v1062 = vsel %vm1061, %v1056, %v1058
    %v1063 = vsel %vm1061, %v1058, %v1060
    %1067 = vrot.lane.b32.xlu0 %v1023, 124
    %v1068 = vpop.permute.xlu0 %1067
    %1069 = vrot.lane.b32.xlu0 %v1024, 124
    %v1070 = vpop.permute.xlu0 %1069
    %1071 = vrot.lane.b32.xlu0 %v1025, 124
    %v1072 = vpop.permute.xlu0 %1071
    %v1073 = vsel %vm73, %v1068, %v1070
    %v1074 = vsel %vm73, %v1070, %v1072
    %1078 = vrot.lane.b32.xlu0 %v1024, 123
    %v1079 = vpop.permute.xlu0 %1078
    %1080 = vrot.lane.b32.xlu0 %v1025, 123
    %v1081 = vpop.permute.xlu0 %1080
    %vm1082 = vcmask 1006592
    %v1083 = vsel %vm1082, %v1079, %v1081
    %1090 = vrot.lane.b32.xlu0 %v1026, 122
    %v1091 = vpop.permute.xlu0 %1090
    %1092 = vrot.lane.b32.xlu0 %v1027, 122
    %v1093 = vpop.permute.xlu0 %1092
    %1094 = vrot.lane.b32.xlu0 %v1028, 122
    %v1095 = vpop.permute.xlu0 %1094
    %v1096 = vsel %vm85, %v1091, %v1093
    %v1097 = vsel %vm85, %v1093, %v1095
    %1101 = vrot.lane.b32.xlu0 %v1026, 121
    %v1102 = vpop.permute.xlu0 %1101
    %1103 = vrot.lane.b32.xlu0 %v1027, 121
    %v1104 = vpop.permute.xlu0 %1103
    %1105 = vrot.lane.b32.xlu0 %v1028, 121
    %v1106 = vpop.permute.xlu0 %1105
    %vm1107 = vcmask 990208
    %v1108 = vsel %vm1107, %v1102, %v1104
    %v1109 = vsel %vm1107, %v1104, %v1106
    %1113 = vrot.lane.b32.xlu0 %v1026, 120
    %v1114 = vpop.permute.xlu0 %1113
    %1115 = vrot.lane.b32.xlu0 %v1027, 120
    %v1116 = vpop.permute.xlu0 %1115
    %1117 = vrot.lane.b32.xlu0 %v1028, 120
    %v1118 = vpop.permute.xlu0 %1117
    %v1119 = vsel %vm97, %v1114, %v1116
    %v1120 = vsel %vm97, %v1116, %v1118
    %1124 = vrot.lane.b32.xlu0 %v1026, 119
    %v1125 = vpop.permute.xlu0 %1124
    %1126 = vrot.lane.b32.xlu0 %v1027, 119
    %v1127 = vpop.permute.xlu0 %1126
    %1128 = vrot.lane.b32.xlu0 %v1028, 119
    %v1129 = vpop.permute.xlu0 %1128
    %vm1130 = vcmask 973824
    %v1131 = vsel %vm1130, %v1125, %v1127
    %v1132 = vsel %vm1130, %v1127, %v1129
    %1136 = vrot.lane.b32.xlu0 %v1026, 118
    %v1137 = vpop.permute.xlu0 %1136
    %1138 = vrot.lane.b32.xlu0 %v1027, 118
    %v1139 = vpop.permute.xlu0 %1138
    %1140 = vrot.lane.b32.xlu0 %v1028, 118
    %v1141 = vpop.permute.xlu0 %1140
    %v1142 = vsel %vm107, %v1137, %v1139
    %v1143 = vsel %vm107, %v1139, %v1141
    %v1147 = vpack.c.bf16 %v1039, %v1023
    %v1148 = vpack.c.bf16 %v1040, %v1024
    %v1149 = vpack.c.bf16 %v1037, %v1025
    %v1150 = vpack.c.bf16 %v1062, %v1050
    %v1151 = vpack.c.bf16 %v1063, %v1051
    %v1152 = vpack.c.bf16 %v1060, %v1049
    %v1153 = vpack.c.bf16 %v1079, %v1073
    %v1154 = vpack.c.bf16 %v1083, %v1074
    %v1155 = vpack.c.bf16 %v1081, %v1072
    %v1156 = vpack.c.bf16 %v1102, %v1091
    %v1157 = vpack.c.bf16 %v1108, %v1096
    %v1158 = vpack.c.bf16 %v1109, %v1097
    %v1159 = vpack.c.bf16 %v1125, %v1114
    %v1160 = vpack.c.bf16 %v1131, %v1119
    %v1161 = vpack.c.bf16 %v1132, %v1120
    %v1162 = vpack.c.bf16 %v1137, %v1137
    %v1163 = vpack.c.bf16 %v1142, %v1142
    %v1164 = vpack.c.bf16 %v1143, %v1143
    %v1165 = vld [vmem:[%s3] sm:$0xff]
    %v1166 = vld [vmem:[%s3 + $0x8] sm:$0xff]
    %1168 = vset.pattern.permute.xlu0 0
    %1169 = vperm.xlu0 %1168, %v1165
    %v1170 = vpop.permute.xlu0 %1169
    %1173 = vset.pattern.permute.xlu0 0
    %1174 = vperm.xlu0 %1173, %v1166
    %v1175 = vpop.permute.xlu0 %1174
    %v1179 = vunpack.c.l.b16 %v1021
    %v1180 = vunpack.c.l.b16 %v1022
    %v1181 = vpack.c.b16 %v1180, %v1179
    %1200 = vrot.lane.b32.xlu0 %v1147, 5
    %v1201 = vpop.permute.xlu0 %1200
    %1202 = vrot.lane.b32.xlu0 %v1148, 5
    %v1203 = vpop.permute.xlu0 %1202
    %1204 = vrot.lane.b32.xlu0 %v1149, 5
    %v1205 = vpop.permute.xlu0 %1204
    %1206 = vrot.lane.b32.xlu0 %v1150, 5
    %v1207 = vpop.permute.xlu0 %1206
    %1208 = vrot.lane.b32.xlu0 %v1151, 5
    %v1209 = vpop.permute.xlu0 %1208
    %1210 = vrot.lane.b32.xlu0 %v1152, 5
    %v1211 = vpop.permute.xlu0 %1210
    %1212 = vrot.lane.b32.xlu0 %v1153, 5
    %v1213 = vpop.permute.xlu0 %1212
    %1214 = vrot.lane.b32.xlu0 %v1154, 5
    %v1215 = vpop.permute.xlu0 %1214
    %1216 = vrot.lane.b32.xlu0 %v1155, 5
    %v1217 = vpop.permute.xlu0 %1216
    %1218 = vrot.lane.b32.xlu0 %v1156, 5
    %v1219 = vpop.permute.xlu0 %1218
    %1220 = vrot.lane.b32.xlu0 %v1157, 5
    %v1221 = vpop.permute.xlu0 %1220
    %1222 = vrot.lane.b32.xlu0 %v1158, 5
    %v1223 = vpop.permute.xlu0 %1222
    %1224 = vrot.lane.b32.xlu0 %v1159, 5
    %v1225 = vpop.permute.xlu0 %1224
    %1226 = vrot.lane.b32.xlu0 %v1160, 5
    %v1227 = vpop.permute.xlu0 %1226
    %1228 = vrot.lane.b32.xlu0 %v1161, 5
    %v1229 = vpop.permute.xlu0 %1228
    %1230 = vrot.lane.b32.xlu0 %v1162, 5
    %v1231 = vpop.permute.xlu0 %1230
    %1232 = vrot.lane.b32.xlu0 %v1163, 5
    %v1233 = vpop.permute.xlu0 %1232
    %1234 = vrot.lane.b32.xlu0 %v1164, 5
    %v1235 = vpop.permute.xlu0 %1234
    %vm1236 = vcmask 39936
    %v1237 = vsel %vm1236, %v1201, %v1203
    %v1238 = vsel %vm1236, %v1203, %v1205
    %v1239 = vsel %vm1236, %v1207, %v1209
    %v1240 = vsel %vm1236, %v1209, %v1211
    %v1241 = vsel %vm1236, %v1213, %v1215
    %v1242 = vsel %vm1236, %v1215, %v1217
    %v1243 = vsel %vm1236, %v1219, %v1221
    %v1244 = vsel %vm1236, %v1221, %v1223
    %v1245 = vsel %vm1236, %v1225, %v1227
    %v1246 = vsel %vm1236, %v1227, %v1229
    %v1247 = vsel %vm1236, %v1231, %v1233
    %v1248 = vsel %vm1236, %v1233, %v1235
    %v1260 = vsel %vm287, %v1181, 0
    %v1263 = vsel %vm291, %v1247, 0
    %v1266 = vsel %vm291, %v1248, 0
    %1268 = vmatprep.subr.bf16.mxu0 %v1238
    %1269 = vmatpush1.bf16.msra.mxu0 %v1237
    %1270 = vmatprep.subr.bf16.mxu0 %v1240
    %1271 = vmatpush1.bf16.msra.mxu0 %v1239
    %1272 = vmatprep.subr.bf16.mxu0 %v1242
    %1273 = vmatpush1.bf16.msra.mxu0 %v1241
    %1274 = vmatprep.subr.bf16.mxu0 %v1244
    %1275 = vmatpush1.bf16.msra.mxu0 %v1243
    %1276 = vmatprep.subr.bf16.mxu0 %v1246
    %1277 = vmatpush1.bf16.msra.mxu0 %v1245
    %1278 = vmatprep.subr.bf16.mxu0 %v1266
    %1279 = vmatpush1.bf16.msra.mxu0 %v1263
    %1280 = vmatprep.subr.bf16.mxu0 0
    %1281 = vmatpush1.bf16.msra.mxu0 0
    %1282 = vmatprep.subr.bf16.mxu0 0
    %1283 = vmatpush1.bf16.msra.mxu0 0
    %1284 = vmatprep.subr.bf16.mxu0 0
    %1285 = vmatpush1.bf16.msra.mxu0 0
    %1286 = vmatprep.subr.bf16.mxu0 0
    %1287 = vmatpush1.bf16.msra.mxu0 0
    %1288 = vmatprep.subr.bf16.mxu0 0
    %1289 = vmatpush1.bf16.msra.mxu0 0
    %1290 = vmatprep.subr.bf16.mxu0 0
    %1291 = vmatpush1.bf16.msra.mxu0 0
    %1292 = vmatprep.subr.bf16.mxu0 0
    %1293 = vmatpush1.bf16.msra.mxu0 0
    %1294 = vmatprep.subr.bf16.mxu0 0
    %1295 = vmatpush1.bf16.msra.mxu0 0
    %1296 = vmatprep.subr.bf16.mxu0 0
    %1297 = vmatpush1.bf16.msra.mxu0 0
    %1298 = vmatprep.subr.bf16.mxu0 0
    %1299 = vmatpush1.bf16.msra.mxu0 0
    %1300 = vmatprep.mubr.bf16.mxu0 0
    %1301 = vmatmul.mubr.bf16.gmra.mrb[0].mxu0 %v1260
    %v1302 = vpop.f32.mrb[0].mxu0
    %v1303 = vadd.f32 %v1170, %v1302
    %v1304 = vpop.f32.mrb[0].mxu0
    %v1305 = vadd.f32 %v1170, %v1304
    %v1306 = vpop.f32.mrb[0].mxu0
    %v1307 = vadd.f32 %v1175, %v1306
    %v1308 = vpop.f32.mrb[0].mxu0
    %v1309 = vadd.f32 %v1175, %v1308
    %1310 = vdwg.mxu0
    %v1311 = vadd.f32 %v1017, %v1303
    %v1312 = vadd.f32 %v1018, %v1305
    %v1313 = vadd.f32 %v1019, %v1307
    %v1314 = vadd.f32 %v1020, %v1309
    %1315 = vst [vmem:[#allocation3] sm:$0xff] %v1311
    %1316 = vst [vmem:[#allocation3 + $0x8] sm:$0xff] %v1312
    %1317 = vst [vmem:[#allocation3 + $0x10] sm:$0xff] %v1313
    %1318 = vst [vmem:[#allocation3 + $0x18] sm:$0xff] %v1314
    // Predicated region
    $region50: #{tpu_custom_call.1} parent=1 // pred_check
      _
    $region51: #{tpu_custom_call.1} parent=1 // pred_check_branch
      %1320 = sbr.rel (0) target = $region53
    $region52: #{tpu_custom_call.1} parent=1 // pred_region
      %s1322 = ssub.s32 512, 512
      %1323 = vsyncadd [#allocation4], %s1322
      %s1324 = sshll.u32 [#allocation3], 4
      %s1325 = int_to_ptr.vmem [resolvable:$true] %s1324
      %1330 = dma.vmem_to_hbm [thread:$0]  %s1325, 512, %s12, [#allocation4], 256, 256, 16
    $region53: #{tpu_custom_call.1} parent=1 // pred_fallthru
      _
    // Predicated region
    $region54: #{tpu_custom_call.1} parent=1 // pred_check
      _
    $region55: #{tpu_custom_call.1} parent=1 // pred_check_branch
      %1332 = sbr.rel (0) target = $region57
    $region56: #{tpu_custom_call.1} parent=1 // pred_region
      %1333 = dma.done [#allocation4], 512
    $region57: #{tpu_custom_call.1} parent=1 // pred_fallthru
      _
    %1334 = vsyncpa [#allocation4], 1

</llo_original>
